<compile_context>
chip_gen: v7x
topology: tpu7x:2x2x1
jax: 0.10.0
libtpu: 0.0.40
codegen_flags: <defaults>
</compile_context>

<pallas_src>
import functools

import numpy as np

import jax
import jax.numpy as jnp
from jax.experimental import pallas as pl
from jax.experimental.pallas import tpu as pltpu


def _round_up(v, m):
    return ((v + m - 1) // m) * m


def _pick_lane_tile(l_pad):
    # Prefer >=2 lane blocks so the "parallel" grid axis can feed the second
    # TensorCore on v7x megacore; v5e/v6e (1 TC) are unaffected.
    for t in (512, 256, 128):
        if l_pad % t == 0 and l_pad // t >= 2:
            return t
    return l_pad


def _default_vmem_limit():
    try:
        cap = int(pltpu.get_tpu_info().vmem_capacity_bytes)
    except Exception:
        cap = 64 * 1024 * 1024          # conservative (v7x per-core VMEM)
    # leave headroom; never below 32 MiB, never above 96 MiB
    return int(min(max(cap * 3 // 4, 32 * 1024 * 1024), 96 * 1024 * 1024))


# --------------------------------------------------------------------------
# Pallas kernel: one grid step == one lane block; levels are an in-kernel
# statically-unrolled band loop (all band offsets/sizes are compile-time).
# --------------------------------------------------------------------------
def _dag_prop_kernel(params_ref, x_ref, adj_ref, out_ref, out_acc, *,
                     root_weight, leaf_end, bands):
    b_l = params_ref[0]                  # lin_l bias  (scalar, SMEM)
    w_r = params_ref[1]                  # lin_r weight (scalar, SMEM)
    n_pad = out_acc.shape[0]

    # ---- init: leaf band -> tanh(x); every other row -> lin_r contribution
    out_acc[0:leaf_end, :] = jnp.tanh(x_ref[0:leaf_end, :].astype(jnp.float32))
    if leaf_end < n_pad:
        rest = x_ref[leaf_end:, :].astype(jnp.float32)
        if root_weight:
            base = jnp.where(rest != 0.0, w_r * rest, 0.0)
        else:
            base = jnp.zeros_like(rest)
        out_acc[leaf_end:, :] = base

    # ---- level-banded propagation.  adjacency rows are pre-scaled host-side
    # by w_l (and 1/in-degree for aggr='mean'), so the update is just
    # tanh(state + agg + b_l).  Only the band's rows are computed / stored.
    # TODO(synk): for very deep DAGs switch the unrolled Python loop to
    # pl.loop with a scalar-prefetched (offset, size) band table.
    for off, size in bands:
        adj_band = adj_ref[off:off + size, :]                      # [band, Np]
        agg = jnp.dot(adj_band, out_acc[...],
                      preferred_element_type=jnp.float32)          # [band, TL]
        out_acc[off:off + size, :] = jnp.tanh(
            out_acc[off:off + size, :] + agg + b_l)

    out_ref[...] = out_acc[...].astype(out_ref.dtype)


# --------------------------------------------------------------------------
# pallas_call wrapper (jitted; schedule-derived sizes are static).
# --------------------------------------------------------------------------
@functools.partial(
    jax.jit,
    static_argnames=("leaf_end", "bands", "lane_tile", "root_weight",
                     "vmem_limit_bytes"))
def _dag_prop_pallas(x_slab, adj, params, *, leaf_end, bands, lane_tile,
                     root_weight, vmem_limit_bytes):
    n_pad, l_pad = x_slab.shape
    n_lane_blocks = l_pad // lane_tile

    kernel = functools.partial(_dag_prop_kernel, root_weight=root_weight,
                               leaf_end=leaf_end, bands=bands)

    itemsize = x_slab.dtype.itemsize
    band_rows = sum(s for _, s in bands)
    flops = 2 * band_rows * n_pad * l_pad + 4 * n_pad * l_pad
    transcendentals = (leaf_end + band_rows) * l_pad
    bytes_accessed = (2 * n_pad * l_pad * itemsize      # x slab + output
                      + n_pad * n_pad * 4               # adjacency (f32)
                      + 4 * 4)                          # params

    return pl.pallas_call(
        kernel,
        out_shape=jax.ShapeDtypeStruct((n_pad, l_pad), x_slab.dtype),
        grid_spec=pltpu.PrefetchScalarGridSpec(
            num_scalar_prefetch=0,
            grid=(n_lane_blocks,),
            in_specs=[
                pl.BlockSpec(memory_space=pltpu.MemorySpace.SMEM),      # params
                pl.BlockSpec((n_pad, lane_tile), lambda i: (0, i)),     # x slab
                # whole-array VMEM resident: constant across the grid, so a
                # single copy (no double-buffering of the dominant consumer).
                pl.BlockSpec(memory_space=pltpu.MemorySpace.VMEM),      # adjacency
            ],
            out_specs=pl.BlockSpec((n_pad, lane_tile), lambda i: (0, i)),
            scratch_shapes=[
                pltpu.VMEM((n_pad, lane_tile), jnp.float32),   # f32 node-state acc
            ],
        ),
        compiler_params=pltpu.CompilerParams(
            dimension_semantics=("parallel",),
            vmem_limit_bytes=vmem_limit_bytes,
        ),
        cost_estimate=pl.CostEstimate(
            flops=int(flops), transcendentals=int(transcendentals),
            bytes_accessed=int(bytes_accessed)),
    )(params, x_slab, adj)


# --------------------------------------------------------------------------
# Host-side schedule (mirrors the data-dependent PyTorch while loop).
# --------------------------------------------------------------------------
def _compute_level_schedule(e_src, e_dst, num_nodes):
    indeg = np.zeros(num_nodes, np.int64)
    np.add.at(indeg, e_dst, 1)
    level = np.where(indeg == 0, 0, -1).astype(np.int64)
    visited = level == 0
    if not visited.any():
        raise ValueError("DAG has no leaves (in-degree-0 nodes)")
    previous = np.where(visited)[0]
    steps = 0
    while not visited.all():
        steps += 1
        if steps > num_nodes:
            raise ValueError("graph is not a DAG reachable from its leaves")
        cand = np.unique(e_dst[np.isin(e_src, previous)])
        nxt = np.array([f for f in cand
                        if (not visited[f])
                        and visited[e_src[e_dst == f]].all()], np.int64)
        if nxt.size == 0:
            raise ValueError("propagation stalled: bad DAG / batching layout")
        level[nxt] = steps
        visited[nxt] = True
        previous = nxt
    return level


def dag_prop_forward(x, edge_index, batch, w_l, b_l, w_r, *,
                     root_weight=True, aggr="mean"):
    x = jnp.asarray(x)
    edge_index = np.asarray(edge_index)
    batch = np.asarray(batch)
    n_total, channels = x.shape
    if channels != 1:
        raise NotImplementedError(
            "DAGProp.forward only type-checks with a single feature channel")

    counts = np.bincount(batch)
    bsz = counts.size
    nt = int(counts.max())
    if n_total != bsz * nt or not np.all(counts == nt):
        raise NotImplementedError("all graphs must be identical-size template copies")

    num_edges_ref = edge_index.shape[1] // bsz
    e_src = edge_index[0, :num_edges_ref].astype(np.int64)
    e_dst = edge_index[1, :num_edges_ref].astype(np.int64)
    if e_src.size:
        assert e_src.max() < nt and e_dst.max() < nt, "template edges out of range"
        # cheap host check: every graph must carry the identical template edge set
        tmpl_key = np.sort(e_src * (bsz * nt) + e_dst)
        for g in range(1, bsz):
            sg = edge_index[0, g * num_edges_ref:(g + 1) * num_edges_ref].astype(np.int64) - g * nt
            dg = edge_index[1, g * num_edges_ref:(g + 1) * num_edges_ref].astype(np.int64) - g * nt
            if not np.array_equal(np.sort(sg * (bsz * nt) + dg), tmpl_key):
                raise NotImplementedError(
                    "all graphs in the batch must share the template edge set")

    # host-side (NumPy) topological level schedule of the template DAG
    level = _compute_level_schedule(e_src, e_dst, nt)
    n_levels = int(level.max())

    # ---- sort template nodes into contiguous, 8-padded level bands (leaves first)
    row_of = np.zeros(nt, np.int64)
    bands = []
    offset = 0
    leaf_end = 0
    for lv in range(n_levels + 1):
        nodes = np.where(level == lv)[0]
        size_pad = _round_up(len(nodes), 8)
        row_of[nodes] = offset + np.arange(len(nodes))
        if lv == 0:
            leaf_end = size_pad
        else:
            bands.append((int(offset), int(size_pad)))
        offset += size_pad
    bands = tuple(bands)
    n_pad = _round_up(max(offset, 128), 128)        # MXU / lane-aligned K dim

    # ---- [Nt_pad, B*C_pad] slab: template node -> sublanes, graphs*channels -> lanes
    lanes = bsz * channels
    l_pad = _round_up(max(lanes, 128), 128)
    lane_tile = _pick_lane_tile(l_pad)

    slab = jnp.transpose(x.reshape(bsz, nt, channels), (1, 0, 2)).reshape(nt, lanes)
    x_slab = jnp.zeros((n_pad, l_pad), x.dtype).at[jnp.asarray(row_of), :lanes].set(slab)

    # ---- adjacency with w_l and (optional) mean normalisation folded in
    adj_np = np.zeros((n_pad, n_pad), np.float64)   # adj[father, child] = #edges
    np.add.at(adj_np, (row_of[e_dst], row_of[e_src]), 1.0)
    if aggr == "mean":
        deg = adj_np.sum(axis=1, keepdims=True)
        adj_np = np.divide(adj_np, deg, out=np.zeros_like(adj_np), where=deg > 0)
    adj = jnp.asarray(adj_np, jnp.float32) * jnp.asarray(w_l, jnp.float32)

    params = jnp.array([b_l, w_r, 0.0, 0.0], dtype=jnp.float32)

    out_slab = _dag_prop_pallas(
        x_slab, adj, params, leaf_end=int(leaf_end), bands=bands,
        lane_tile=int(lane_tile), root_weight=bool(root_weight),
        vmem_limit_bytes=_default_vmem_limit())

    out = out_slab[jnp.asarray(row_of), :lanes].reshape(nt, bsz, channels)
    return jnp.transpose(out, (1, 0, 2)).reshape(n_total, channels)


# --------------------------------------------------------------------------
# Thin module wrapper mirroring the PyTorch DAGProp interface.
# --------------------------------------------------------------------------
class DAGPropPallas:
    def __init__(self, in_channels=1, out_channels=1, root_weight=True,
                 bias=True, aggr="mean", key=None):
        if in_channels != 1 or out_channels != 1:
            raise NotImplementedError("reference forward only supports 1 channel")
        self.in_channels, self.out_channels = in_channels, out_channels
        self.root_weight, self.aggr = root_weight, aggr
        key = jax.random.PRNGKey(0) if key is None else key
        kl, kb, kr = jax.random.split(key, 3)
        # torch Linear(1,1) init: U(-1, 1) (fan_in = 1)
        self.w_l = jax.random.uniform(kl, (), minval=-1.0, maxval=1.0)
        self.b_l = (jax.random.uniform(kb, (), minval=-1.0, maxval=1.0)
                    if bias else jnp.zeros(()))
        self.w_r = (jax.random.uniform(kr, (), minval=-1.0, maxval=1.0)
                    if root_weight else jnp.zeros(()))

    def __call__(self, x, edge_index, batch):
        return dag_prop_forward(x, edge_index, batch, self.w_l, self.b_l,
                                self.w_r, root_weight=self.root_weight,
                                aggr=self.aggr)

    def __repr__(self):
        return "{}({}, {}, aggr={}, nonlinearity=tanh)".format(
            self.__class__.__name__, self.in_channels, self.out_channels, self.aggr)


# --------------------------------------------------------------------------
# NumPy reference: direct transcription of DAGProp.forward (for verification).
# --------------------------------------------------------------------------
def _dagprop_reference_numpy(x, edge_index, batch, w_l, b_l, w_r,
                             root_weight=True, aggr="mean"):
    x = np.array(x, dtype=np.float64, copy=True)
    n, _ = x.shape
    counts = np.bincount(batch)
    bsz, max_num_nodes = counts.size, int(counts.max())
    num_edges_ref = edge_index.shape[1] // bsz

    out = np.zeros_like(x)
    visited = np.zeros(n, np.int64)
    indeg = np.zeros(n, np.int64)
    np.add.at(indeg, edge_index[1], 1)
    leaves = np.where(indeg == 0)[0]
    out[leaves] = np.tanh(x[leaves])
    visited[leaves] = 1
    if root_weight:
        xt = x.copy()
        xt[leaves] = 0.0
        mask = np.unique(np.nonzero(xt)[0])
        out[mask] = w_r * x[mask]
    previous = leaves[leaves < max_num_nodes]
    adj_c = edge_index[:, :num_edges_ref]
    steps = 0
    while visited.sum() != n:
        steps += 1
        assert steps <= n, "reference did not converge"
        cand = np.unique(adj_c[1, np.isin(adj_c[0], previous)])
        nxt = np.array([f for f in cand
                        if visited[adj_c[0, adj_c[1] == f]].sum()
                        == int((adj_c[1] == f).sum())], np.int64)
        for g in range(bsz):
            off = g * max_num_nodes
            for f in nxt:
                ch = adj_c[0, adj_c[1] == f] + off
                vals = out[ch, 0]
                agg = vals.mean() if aggr == "mean" else vals.sum()
                out[f + off, 0] = np.tanh(out[f + off, 0] + (w_l * agg + b_l))
                visited[f + off] = 1
        previous = nxt
    return out


if __name__ == "__main__":
    key = jax.random.PRNGKey(0)
    kx, kw = jax.random.split(key)

    batch_size, n_template, channels = 2, 8, 1
    # Template DAG (edges are child -> father); identical copy per graph.
    e_src = np.array([0, 1, 2, 3, 4, 5, 6, 0], np.int64)
    e_dst = np.array([4, 4, 5, 5, 6, 6, 7, 7], np.int64)
    edge_index = np.concatenate(
        [np.stack([e_src + g * n_template, e_dst + g * n_template])
         for g in range(batch_size)], axis=1)                       # [2, 16]
    batch = np.repeat(np.arange(batch_size), n_template)            # [16]

    x = jax.random.normal(kx, (batch_size * n_template, channels), jnp.float32)
    x = x.at[6, 0].set(0.0)   # exercise the "x == 0 -> no lin_r contribution" path

    module = DAGPropPallas(1, 1, root_weight=True, bias=True, aggr="mean", key=kw)
    out = module(x, edge_index, batch)
    out = jax.block_until_ready(out)

    ref = _dagprop_reference_numpy(np.asarray(x), edge_index, batch,
                                   float(module.w_l), float(module.b_l),
                                   float(module.w_r), root_weight=True,
                                   aggr="mean")
    assert out.shape == x.shape
    # exact (non-approx) normalisation now -> only f32-vs-f64 rounding remains
    assert np.allclose(np.asarray(out, np.float64), ref, atol=1e-4, rtol=1e-4), (
        float(np.abs(np.asarray(out, np.float64) - ref).max()))

    print("KERNEL_OK")
</pallas_src>

<mosaic_0001>
module attributes {stable_mosaic.version = 11 : i64} {
  func.func @_dag_prop_kernel(%arg0: i32, %arg1: memref<4xf32, #tpu.memory_space<smem>>, %arg2: memref<128x128xf32, #tpu.memory_space<vmem>>, %arg3: memref<128x128xf32, #tpu.memory_space<vmem>>, %arg4: memref<128x128xf32, #tpu.memory_space<vmem>>, %arg5: memref<128x128xf32, #tpu.memory_space<vmem>>) attributes {dimension_semantics = [#tpu.dimension_semantics<parallel>], iteration_bounds = array<i64: 1>, scalar_prefetch = 0 : i64, scratch_operands = 1 : i64, tpu.core_type = #tpu.core_type<tc>, window_params = [{transform_indices = @transform_0, window_bounds = array<i64: 4>}, {transform_indices = @transform_1, window_bounds = array<i64: 128, 128>}, {pipeline_mode = #tpu.pipeline_mode<synchronous>, transform_indices = @transform_2, window_bounds = array<i64: 128, 128>}, {transform_indices = @transform_3, window_bounds = array<i64: 128, 128>}]} {
    %c0 = arith.constant 0 : index
    %0 = memref.load %arg1[%c0] : memref<4xf32, #tpu.memory_space<smem>>
    %c1 = arith.constant 1 : index
    %1 = memref.load %arg1[%c1] : memref<4xf32, #tpu.memory_space<smem>>
    %c0_0 = arith.constant 0 : index
    %c0_1 = arith.constant 0 : index
    %2 = vector.load %arg2[%c0_0, %c0_1] : memref<128x128xf32, #tpu.memory_space<vmem>>, vector<8x128xf32>
    %3 = math.tanh %2 : vector<8x128xf32>
    %c0_2 = arith.constant 0 : index
    %c0_3 = arith.constant 0 : index
    %4 = vector.load %arg5[%c0_2, %c0_3] : memref<128x128xf32, #tpu.memory_space<vmem>>, vector<8x128xf32>
    tpu.vector_store %arg5[%c0_2, %c0_3], %3 {strides = array<i32>} : memref<128x128xf32, #tpu.memory_space<vmem>>, vector<8x128xf32>,
    %c8 = arith.constant 8 : index
    %c0_4 = arith.constant 0 : index
    %5 = vector.load %arg2[%c8, %c0_4] : memref<128x128xf32, #tpu.memory_space<vmem>>, vector<120x128xf32>
    %cst = arith.constant 0.000000e+00 : f32
    %6 = vector.broadcast %cst : f32 to vector<120x128xf32>
    %7 = arith.cmpf one, %5, %6 : vector<120x128xf32>
    %8 = vector.broadcast %1 : f32 to vector<120x128xf32>
    %9 = arith.mulf %8, %5 : vector<120x128xf32>
    %cst_5 = arith.constant 0.000000e+00 : f32
    %10 = vector.broadcast %cst_5 : f32 to vector<120x128xf32>
    %11 = arith.select %7, %9, %10 : vector<120x128xi1>, vector<120x128xf32>
    %c8_6 = arith.constant 8 : index
    %c0_7 = arith.constant 0 : index
    %12 = vector.load %arg5[%c8_6, %c0_7] : memref<128x128xf32, #tpu.memory_space<vmem>>, vector<120x128xf32>
    tpu.vector_store %arg5[%c8_6, %c0_7], %11 {strides = array<i32>} : memref<128x128xf32, #tpu.memory_space<vmem>>, vector<120x128xf32>,
    %c8_8 = arith.constant 8 : index
    %c0_9 = arith.constant 0 : index
    %13 = vector.load %arg3[%c8_8, %c0_9] : memref<128x128xf32, #tpu.memory_space<vmem>>, vector<8x128xf32>
    %c0_10 = arith.constant 0 : index
    %c0_11 = arith.constant 0 : index
    %14 = vector.load %arg5[%c0_10, %c0_11] : memref<128x128xf32, #tpu.memory_space<vmem>>, vector<128x128xf32>
    %cst_12 = arith.constant dense<0.000000e+00> : vector<8x128xf32>
    %15 = tpu.matmul %13, %14, %cst_12 {dimension_numbers = #tpu.dot_dimension_numbers<[1], [0], [0], [1], [0, 0, 1, 1], [], []>} : vector<8x128xf32>, vector<128x128xf32>, vector<8x128xf32> -> vector<8x128xf32>
    %c8_13 = arith.constant 8 : index
    %c0_14 = arith.constant 0 : index
    %16 = vector.load %arg5[%c8_13, %c0_14] : memref<128x128xf32, #tpu.memory_space<vmem>>, vector<8x128xf32>
    %17 = arith.addf %16, %15 : vector<8x128xf32>
    %18 = vector.broadcast %0 : f32 to vector<8x128xf32>
    %19 = arith.addf %17, %18 : vector<8x128xf32>
    %20 = math.tanh %19 : vector<8x128xf32>
    %c8_15 = arith.constant 8 : index
    %c0_16 = arith.constant 0 : index
    %21 = vector.load %arg5[%c8_15, %c0_16] : memref<128x128xf32, #tpu.memory_space<vmem>>, vector<8x128xf32>
    tpu.vector_store %arg5[%c8_15, %c0_16], %20 {strides = array<i32>} : memref<128x128xf32, #tpu.memory_space<vmem>>, vector<8x128xf32>,
    %c16 = arith.constant 16 : index
    %c0_17 = arith.constant 0 : index
    %22 = vector.load %arg3[%c16, %c0_17] : memref<128x128xf32, #tpu.memory_space<vmem>>, vector<8x128xf32>
    %c0_18 = arith.constant 0 : index
    %c0_19 = arith.constant 0 : index
    %23 = vector.load %arg5[%c0_18, %c0_19] : memref<128x128xf32, #tpu.memory_space<vmem>>, vector<128x128xf32>
    %cst_20 = arith.constant dense<0.000000e+00> : vector<8x128xf32>
    %24 = tpu.matmul %22, %23, %cst_20 {dimension_numbers = #tpu.dot_dimension_numbers<[1], [0], [0], [1], [0, 0, 1, 1], [], []>} : vector<8x128xf32>, vector<128x128xf32>, vector<8x128xf32> -> vector<8x128xf32>
    %c16_21 = arith.constant 16 : index
    %c0_22 = arith.constant 0 : index
    %25 = vector.load %arg5[%c16_21, %c0_22] : memref<128x128xf32, #tpu.memory_space<vmem>>, vector<8x128xf32>
    %26 = arith.addf %25, %24 : vector<8x128xf32>
    %27 = vector.broadcast %0 : f32 to vector<8x128xf32>
    %28 = arith.addf %26, %27 : vector<8x128xf32>
    %29 = math.tanh %28 : vector<8x128xf32>
    %c16_23 = arith.constant 16 : index
    %c0_24 = arith.constant 0 : index
    %30 = vector.load %arg5[%c16_23, %c0_24] : memref<128x128xf32, #tpu.memory_space<vmem>>, vector<8x128xf32>
    tpu.vector_store %arg5[%c16_23, %c0_24], %29 {strides = array<i32>} : memref<128x128xf32, #tpu.memory_space<vmem>>, vector<8x128xf32>,
    %c24 = arith.constant 24 : index
    %c0_25 = arith.constant 0 : index
    %31 = vector.load %arg3[%c24, %c0_25] : memref<128x128xf32, #tpu.memory_space<vmem>>, vector<8x128xf32>
    %c0_26 = arith.constant 0 : index
    %c0_27 = arith.constant 0 : index
    %32 = vector.load %arg5[%c0_26, %c0_27] : memref<128x128xf32, #tpu.memory_space<vmem>>, vector<128x128xf32>
    %cst_28 = arith.constant dense<0.000000e+00> : vector<8x128xf32>
    %33 = tpu.matmul %31, %32, %cst_28 {dimension_numbers = #tpu.dot_dimension_numbers<[1], [0], [0], [1], [0, 0, 1, 1], [], []>} : vector<8x128xf32>, vector<128x128xf32>, vector<8x128xf32> -> vector<8x128xf32>
    %c24_29 = arith.constant 24 : index
    %c0_30 = arith.constant 0 : index
    %34 = vector.load %arg5[%c24_29, %c0_30] : memref<128x128xf32, #tpu.memory_space<vmem>>, vector<8x128xf32>
    %35 = arith.addf %34, %33 : vector<8x128xf32>
    %36 = vector.broadcast %0 : f32 to vector<8x128xf32>
    %37 = arith.addf %35, %36 : vector<8x128xf32>
    %38 = math.tanh %37 : vector<8x128xf32>
    %c24_31 = arith.constant 24 : index
    %c0_32 = arith.constant 0 : index
    %39 = vector.load %arg5[%c24_31, %c0_32] : memref<128x128xf32, #tpu.memory_space<vmem>>, vector<8x128xf32>
    tpu.vector_store %arg5[%c24_31, %c0_32], %38 {strides = array<i32>} : memref<128x128xf32, #tpu.memory_space<vmem>>, vector<8x128xf32>,
    %c0_33 = arith.constant 0 : index
    %c0_34 = arith.constant 0 : index
    %40 = vector.load %arg5[%c0_33, %c0_34] : memref<128x128xf32, #tpu.memory_space<vmem>>, vector<128x128xf32>
    %c0_35 = arith.constant 0 : index
    %c0_36 = arith.constant 0 : index
    %41 = vector.load %arg4[%c0_35, %c0_36] : memref<128x128xf32, #tpu.memory_space<vmem>>, vector<128x128xf32>
    tpu.vector_store %arg4[%c0_35, %c0_36], %40 {strides = array<i32>} : memref<128x128xf32, #tpu.memory_space<vmem>>, vector<128x128xf32>,
    return
  }
  func.func @transform_0(%arg0: i32) -> i32 {
    %c0_i32 = arith.constant 0 : i32
    %c0_i32_0 = arith.constant 0 : i32
    return %c0_i32 : i32
  }
  func.func @transform_1(%arg0: i32) -> (i32, i32) {
    %c0_i32 = arith.constant 0 : i32
    %c0_i32_0 = arith.constant 0 : i32
    return %c0_i32, %arg0 : i32, i32
  }
  func.func @transform_2(%arg0: i32) -> (i32, i32) {
    %c0_i32 = arith.constant 0 : i32
    %c0_i32_0 = arith.constant 0 : i32
    %c0_i32_1 = arith.constant 0 : i32
    return %c0_i32, %c0_i32_0 : i32, i32
  }
  func.func @transform_3(%arg0: i32) -> (i32, i32) {
    %c0_i32 = arith.constant 0 : i32
    %c0_i32_0 = arith.constant 0 : i32
    return %c0_i32, %arg0 : i32, i32
  }
}

</mosaic_0001>

<llo_original>
// kernel: _dag_prop_pallas.1
$region0: #{_dag_prop_pallas.1}
  #allocation0 [shape = 'u32[]', space=smem, size = 0x4, offset = 0x4, fixed_abs, tag = 'smem constant byte address 0x4 - core index']
  #allocation1 [shape = 'u32[144,128]{1,0:T(1,128)}', space=vmem, size = 0x12000, scoped, tag = 'internal scratch']
  #allocation2 [shape = 'f32[128,128]{1,0:T(8,128)}', space=vmem, size = 0x10000, scoped, tag = 'scratch operand']
  %s0 = inlined_call_operand.vmem [shape: f32[4], index: 0, kind: input, shape index: {}]
  %s1 = inlined_call_operand.hbm [shape: f32[128,128], index: 1, kind: input, shape index: {}]
  %s2 = inlined_call_operand.hbm [shape: f32[128,128], index: 2, kind: input, shape index: {}]
  %s3 = inlined_call_operand.hbm [shape: f32[128,128], index: 3, kind: output, shape index: {}]
  %s4 = sld [smem:[#allocation0]]
  $region34: #{_dag_prop_pallas.1} parent=0
    _
  %s6 = ssub.s32 1, %s4
  %s7 = scalar_select 0, %s6, %s4
  $region1: #{_dag_prop_pallas.1} parent=0
    #allocation3 [shape = 'u8[512]{0}', space=smem, size = 0x200, scoped, tag = 'input window, operand 0, single buffered']
    #allocation4 [shape = 's32[1]{0}', space=sflag, size = 0x4, scoped, tag = 'scoped memory for _dag_prop_pallas.1']
    #allocation5 [shape = 's32[1]{0}', space=sflag, size = 0x4, scoped, tag = 'scoped memory for _dag_prop_pallas.1']
    #allocation6 [shape = 's32[1]{0}', space=sflag, size = 0x4, scoped, tag = 'scoped memory for _dag_prop_pallas.1']
    #allocation7 [shape = 'u8[65536]{0}', space=vmem, size = 0x10000, scoped, tag = 'input window, operand 1, single buffered']
    #allocation8 [shape = 'u8[65536]{0}', space=vmem, size = 0x10000, scoped, tag = 'input window, operand 2, single buffered']
    #allocation9 [shape = 's32[1]{0}', space=sflag, size = 0x4, scoped, tag = 'scoped memory for _dag_prop_pallas.1']
    #allocation10 [shape = 'u8[65536]{0}', space=vmem, size = 0x10000, scoped, tag = 'output window, operand 0, single buffered']
    %8 = vsyncpa [#allocation6], 0
    %9 = vsyncpa [#allocation4], 0
    %10 = vsyncpa [#allocation9], 0
    %11 = vsyncpa [#allocation5], 0
    // Predicated region
    $region2: #{_dag_prop_pallas.1} parent=1 // pred_check
      _
    $region3: #{_dag_prop_pallas.1} parent=1 // pred_check_branch
      %13 = sbr.rel (0) target = $region5
    $region4: #{_dag_prop_pallas.1} parent=1 // pred_region
      %s15 = ssub.s32 16, 16
      %16 = vsyncadd [#allocation6], %s15
      %s18 = sshll.u32 %s0, 4
      %s19 = int_to_ptr.vmem [resolvable:$true] %s18
      %21 = dma.vmem_to_smem %s19, 16, [#allocation3], [#allocation6]
    $region5: #{_dag_prop_pallas.1} parent=1 // pred_fallthru
      _
    // Predicated region
    $region6: #{_dag_prop_pallas.1} parent=1 // pred_check
      _
    $region7: #{_dag_prop_pallas.1} parent=1 // pred_check_branch
      %23 = sbr.rel (0) target = $region9
    $region8: #{_dag_prop_pallas.1} parent=1 // pred_region
      %s25 = ssub.s32 2048, 2048
      %26 = vsyncadd [#allocation4], %s25
      %s27 = sshll.u32 [#allocation7], 4
      %s28 = int_to_ptr.vmem [resolvable:$true] %s27
      %33 = dma.hbm_to_vmem [thread:$0]  %s1, 2048, %s28, [#allocation4], 128, 128, 8
    $region9: #{_dag_prop_pallas.1} parent=1 // pred_fallthru
      _
    // Predicated region
    $region10: #{_dag_prop_pallas.1} parent=1 // pred_check
      _
    $region11: #{_dag_prop_pallas.1} parent=1 // pred_check_branch
      %35 = sbr.rel (0) target = $region13
    $region12: #{_dag_prop_pallas.1} parent=1 // pred_region
      %s37 = ssub.s32 2048, 2048
      %38 = vsyncadd [#allocation9], %s37
      %s39 = sshll.u32 [#allocation8], 4
      %s40 = int_to_ptr.vmem [resolvable:$true] %s39
      %45 = dma.hbm_to_vmem [thread:$0]  %s2, 2048, %s40, [#allocation9], 128, 128, 8
    $region13: #{_dag_prop_pallas.1} parent=1 // pred_fallthru
      _
    // Predicated region
    $region14: #{_dag_prop_pallas.1} parent=1 // pred_check
      _
    $region15: #{_dag_prop_pallas.1} parent=1 // pred_check_branch
      %47 = sbr.rel (0) target = $region17
    $region16: #{_dag_prop_pallas.1} parent=1 // pred_region
      %48 = dma.done [#allocation6], 16
    $region17: #{_dag_prop_pallas.1} parent=1 // pred_fallthru
      _
    // Predicated region
    $region18: #{_dag_prop_pallas.1} parent=1 // pred_check
      _
    $region19: #{_dag_prop_pallas.1} parent=1 // pred_check_branch
      %50 = sbr.rel (0) target = $region21
    $region20: #{_dag_prop_pallas.1} parent=1 // pred_region
      %51 = dma.done [#allocation4], 2048
    $region21: #{_dag_prop_pallas.1} parent=1 // pred_fallthru
      _
    // Predicated region
    $region22: #{_dag_prop_pallas.1} parent=1 // pred_check
      _
    $region23: #{_dag_prop_pallas.1} parent=1 // pred_check_branch
      %53 = sbr.rel (0) target = $region25
    $region24: #{_dag_prop_pallas.1} parent=1 // pred_region
      %54 = dma.done [#allocation9], 2048
    $region25: #{_dag_prop_pallas.1} parent=1 // pred_fallthru
      _
    %55 = sfence
    %s56 = sld [smem:[#allocation3]]
    %s57 = sld [smem:[#allocation3 + $0x1]]
    %v58 = vld [vmem:[#allocation7] sm:$0xff]
    %v59 = vtanh.pop %v58
    %60 = vst [vmem:[#allocation2] sm:$0xff] %v59
    %v61 = vld [vmem:[#allocation7 + $0x8] sm:$0xff]
    %v62 = vld [vmem:[#allocation7 + $0x10] sm:$0xff]
    %v63 = vld [vmem:[#allocation7 + $0x18] sm:$0xff]
    %v64 = vld [vmem:[#allocation7 + $0x20] sm:$0xff]
    %v65 = vld [vmem:[#allocation7 + $0x28] sm:$0xff]
    %v66 = vld [vmem:[#allocation7 + $0x30] sm:$0xff]
    %v67 = vld [vmem:[#allocation7 + $0x38] sm:$0xff]
    %v68 = vld [vmem:[#allocation7 + $0x40] sm:$0xff]
    %v69 = vld [vmem:[#allocation7 + $0x48] sm:$0xff]
    %v70 = vld [vmem:[#allocation7 + $0x50] sm:$0xff]
    %v71 = vld [vmem:[#allocation7 + $0x58] sm:$0xff]
    %v72 = vld [vmem:[#allocation7 + $0x60] sm:$0xff]
    %v73 = vld [vmem:[#allocation7 + $0x68] sm:$0xff]
    %v74 = vld [vmem:[#allocation7 + $0x70] sm:$0xff]
    %v75 = vld [vmem:[#allocation7 + $0x78] sm:$0xff]
    %vm76 = vcmp.ne.f32.partialorder %v61, 0.0
    %vm77 = vcmp.ne.f32.partialorder %v62, 0.0
    %vm78 = vcmp.ne.f32.partialorder %v63, 0.0
    %vm79 = vcmp.ne.f32.partialorder %v64, 0.0
    %vm80 = vcmp.ne.f32.partialorder %v65, 0.0
    %vm81 = vcmp.ne.f32.partialorder %v66, 0.0
    %vm82 = vcmp.ne.f32.partialorder %v67, 0.0
    %vm83 = vcmp.ne.f32.partialorder %v68, 0.0
    %vm84 = vcmp.ne.f32.partialorder %v69, 0.0
    %vm85 = vcmp.ne.f32.partialorder %v70, 0.0
    %vm86 = vcmp.ne.f32.partialorder %v71, 0.0
    %vm87 = vcmp.ne.f32.partialorder %v72, 0.0
    %vm88 = vcmp.ne.f32.partialorder %v73, 0.0
    %vm89 = vcmp.ne.f32.partialorder %v74, 0.0
    %vm90 = vcmp.ne.f32.partialorder %v75, 0.0
    %v91 = vstv %s57
    %v92 = vmul.f32 %v91, %v61
    %v93 = vmul.f32 %v91, %v62
    %v94 = vmul.f32 %v91, %v63
    %v95 = vmul.f32 %v91, %v64
    %v96 = vmul.f32 %v91, %v65
    %v97 = vmul.f32 %v91, %v66
    %v98 = vmul.f32 %v91, %v67
    %v99 = vmul.f32 %v91, %v68
    %v100 = vmul.f32 %v91, %v69
    %v101 = vmul.f32 %v91, %v70
    %v102 = vmul.f32 %v91, %v71
    %v103 = vmul.f32 %v91, %v72
    %v104 = vmul.f32 %v91, %v73
    %v105 = vmul.f32 %v91, %v74
    %v106 = vmul.f32 %v91, %v75
    %v107 = vsel %vm76, %v92, 0.0
    %v108 = vsel %vm77, %v93, 0.0
    %v109 = vsel %vm78, %v94, 0.0
    %v110 = vsel %vm79, %v95, 0.0
    %v111 = vsel %vm80, %v96, 0.0
    %v112 = vsel %vm81, %v97, 0.0
    %v113 = vsel %vm82, %v98, 0.0
    %v114 = vsel %vm83, %v99, 0.0
    %v115 = vsel %vm84, %v100, 0.0
    %v116 = vsel %vm85, %v101, 0.0
    %v117 = vsel %vm86, %v102, 0.0
    %v118 = vsel %vm87, %v103, 0.0
    %v119 = vsel %vm88, %v104, 0.0
    %v120 = vsel %vm89, %v105, 0.0
    %v121 = vsel %vm90, %v106, 0.0
    %122 = vst [vmem:[#allocation2 + $0x8] sm:$0xff] %v107
    %123 = vst [vmem:[#allocation2 + $0x10] sm:$0xff] %v108
    %124 = vst [vmem:[#allocation2 + $0x18] sm:$0xff] %v109
    %125 = vst [vmem:[#allocation2 + $0x20] sm:$0xff] %v110
    %126 = vst [vmem:[#allocation2 + $0x28] sm:$0xff] %v111
    %127 = vst [vmem:[#allocation2 + $0x30] sm:$0xff] %v112
    %128 = vst [vmem:[#allocation2 + $0x38] sm:$0xff] %v113
    %129 = vst [vmem:[#allocation2 + $0x40] sm:$0xff] %v114
    %130 = vst [vmem:[#allocation2 + $0x48] sm:$0xff] %v115
    %131 = vst [vmem:[#allocation2 + $0x50] sm:$0xff] %v116
    %132 = vst [vmem:[#allocation2 + $0x58] sm:$0xff] %v117
    %133 = vst [vmem:[#allocation2 + $0x60] sm:$0xff] %v118
    %134 = vst [vmem:[#allocation2 + $0x68] sm:$0xff] %v119
    %135 = vst [vmem:[#allocation2 + $0x70] sm:$0xff] %v120
    %136 = vst [vmem:[#allocation2 + $0x78] sm:$0xff] %v121
    %v137 = vld [vmem:[#allocation8 + $0x8] sm:$0xff]
    %v138 = vld [vmem:[#allocation2] sm:$0xff]
    %v139 = vld [vmem:[#allocation2 + $0x8] sm:$0xff]
    %v140 = vld [vmem:[#allocation2 + $0x10] sm:$0xff]
    %v141 = vld [vmem:[#allocation2 + $0x18] sm:$0xff]
    %v142 = vld [vmem:[#allocation2 + $0x20] sm:$0xff]
    %v143 = vld [vmem:[#allocation2 + $0x28] sm:$0xff]
    %v144 = vld [vmem:[#allocation2 + $0x30] sm:$0xff]
    %v145 = vld [vmem:[#allocation2 + $0x38] sm:$0xff]
    %v146 = vld [vmem:[#allocation2 + $0x40] sm:$0xff]
    %v147 = vld [vmem:[#allocation2 + $0x48] sm:$0xff]
    %v148 = vld [vmem:[#allocation2 + $0x50] sm:$0xff]
    %v149 = vld [vmem:[#allocation2 + $0x58] sm:$0xff]
    %v150 = vld [vmem:[#allocation2 + $0x60] sm:$0xff]
    %v151 = vld [vmem:[#allocation2 + $0x68] sm:$0xff]
    %v152 = vld [vmem:[#allocation2 + $0x70] sm:$0xff]
    %v153 = vld [vmem:[#allocation2 + $0x78] sm:$0xff]
    %154 = vmatprep.subr.mxu0 0.0
    %155 = vmatpush1.msra.mxu0 %v138
    %156 = vmatprep.subr.mxu0 0.0
    %157 = vmatpush1.msra.mxu0 %v139
    %158 = vmatprep.subr.mxu0 0.0
    %159 = vmatpush1.msra.mxu0 %v140
    %160 = vmatprep.subr.mxu0 0.0
    %161 = vmatpush1.msra.mxu0 %v141
    %162 = vmatprep.subr.mxu0 0.0
    %163 = vmatpush1.msra.mxu0 %v142
    %164 = vmatprep.subr.mxu0 0.0
    %165 = vmatpush1.msra.mxu0 %v143
    %166 = vmatprep.subr.mxu0 0.0
    %167 = vmatpush1.msra.mxu0 %v144
    %168 = vmatprep.subr.mxu0 0.0
    %169 = vmatpush1.msra.mxu0 %v145
    %170 = vmatprep.subr.mxu0 0.0
    %171 = vmatpush1.msra.mxu0 %v146
    %172 = vmatprep.subr.mxu0 0.0
    %173 = vmatpush1.msra.mxu0 %v147
    %174 = vmatprep.subr.mxu0 0.0
    %175 = vmatpush1.msra.mxu0 %v148
    %176 = vmatprep.subr.mxu0 0.0
    %177 = vmatpush1.msra.mxu0 %v149
    %178 = vmatprep.subr.mxu0 0.0
    %179 = vmatpush1.msra.mxu0 %v150
    %180 = vmatprep.subr.mxu0 0.0
    %181 = vmatpush1.msra.mxu0 %v151
    %182 = vmatprep.subr.mxu0 0.0
    %183 = vmatpush1.msra.mxu0 %v152
    %184 = vmatprep.subr.mxu0 0.0
    %185 = vmatpush1.msra.mxu0 %v153
    %186 = vmatprep.subr.mxu0 0.0
    %187 = vmatpush1.msra.mxu0 0.0
    %188 = vmatprep.subr.mxu0 0.0
    %189 = vmatpush1.msra.mxu0 0.0
    %190 = vmatprep.subr.mxu0 0.0
    %191 = vmatpush1.msra.mxu0 0.0
    %192 = vmatprep.subr.mxu0 0.0
    %193 = vmatpush1.msra.mxu0 0.0
    %194 = vmatprep.subr.mxu0 0.0
    %195 = vmatpush1.msra.mxu0 0.0
    %196 = vmatprep.subr.mxu0 0.0
    %197 = vmatpush1.msra.mxu0 0.0
    %198 = vmatprep.subr.mxu0 0.0
    %199 = vmatpush1.msra.mxu0 0.0
    %200 = vmatprep.subr.mxu0 0.0
    %201 = vmatpush1.msra.mxu0 0.0
    %202 = vmatprep.subr.mxu0 0.0
    %203 = vmatpush1.msra.mxu0 0.0
    %204 = vmatprep.subr.mxu0 0.0
    %205 = vmatpush1.msra.mxu0 0.0
    %206 = vmatprep.subr.mxu0 0.0
    %207 = vmatpush1.msra.mxu0 0.0
    %208 = vmatprep.subr.mxu0 0.0
    %209 = vmatpush1.msra.mxu0 0.0
    %210 = vmatprep.subr.mxu0 0.0
    %211 = vmatpush1.msra.mxu0 0.0
    %212 = vmatprep.subr.mxu0 0.0
    %213 = vmatpush1.msra.mxu0 0.0
    %214 = vmatprep.subr.mxu0 0.0
    %215 = vmatpush1.msra.mxu0 0.0
    %216 = vmatprep.subr.mxu0 0.0
    %217 = vmatpush1.msra.mxu0 0.0
    %218 = vmatprep.mubr.f32.mxu0 0.0
    %219 = vmatmul.mubr.f32.gmra.mrb[0].mxu0 %v137
    %v220 = vpop.f32.mrb[0].mxu0
    %v221 = vadd.f32 0.0, %v220
    %v222 = vpop.f32.mrb[0].mxu0
    %223 = vdwg.mxu0
    %v224 = vld [vmem:[#allocation2 + $0x8] sm:$0xff]
    %v225 = vadd.f32 %v224, %v221
    %v226 = vstv %s56
    %v227 = vadd.f32 %v225, %v226
    %v228 = vtanh.pop %v227
    %229 = vst [vmem:[#allocation2 + $0x8] sm:$0xff] %v228
    %v230 = vld [vmem:[#allocation8 + $0x10] sm:$0xff]
    %v231 = vld [vmem:[#allocation2] sm:$0xff]
    %v232 = vld [vmem:[#allocation2 + $0x8] sm:$0xff]
    %v233 = vld [vmem:[#allocation2 + $0x10] sm:$0xff]
    %v234 = vld [vmem:[#allocation2 + $0x18] sm:$0xff]
    %v235 = vld [vmem:[#allocation2 + $0x20] sm:$0xff]
    %v236 = vld [vmem:[#allocation2 + $0x28] sm:$0xff]
    %v237 = vld [vmem:[#allocation2 + $0x30] sm:$0xff]
    %v238 = vld [vmem:[#allocation2 + $0x38] sm:$0xff]
    %v239 = vld [vmem:[#allocation2 + $0x40] sm:$0xff]
    %v240 = vld [vmem:[#allocation2 + $0x48] sm:$0xff]
    %v241 = vld [vmem:[#allocation2 + $0x50] sm:$0xff]
    %v242 = vld [vmem:[#allocation2 + $0x58] sm:$0xff]
    %v243 = vld [vmem:[#allocation2 + $0x60] sm:$0xff]
    %v244 = vld [vmem:[#allocation2 + $0x68] sm:$0xff]
    %v245 = vld [vmem:[#allocation2 + $0x70] sm:$0xff]
    %v246 = vld [vmem:[#allocation2 + $0x78] sm:$0xff]
    %247 = vmatprep.subr.mxu0 0.0
    %248 = vmatpush1.msra.mxu0 %v231
    %249 = vmatprep.subr.mxu0 0.0
    %250 = vmatpush1.msra.mxu0 %v232
    %251 = vmatprep.subr.mxu0 0.0
    %252 = vmatpush1.msra.mxu0 %v233
    %253 = vmatprep.subr.mxu0 0.0
    %254 = vmatpush1.msra.mxu0 %v234
    %255 = vmatprep.subr.mxu0 0.0
    %256 = vmatpush1.msra.mxu0 %v235
    %257 = vmatprep.subr.mxu0 0.0
    %258 = vmatpush1.msra.mxu0 %v236
    %259 = vmatprep.subr.mxu0 0.0
    %260 = vmatpush1.msra.mxu0 %v237
    %261 = vmatprep.subr.mxu0 0.0
    %262 = vmatpush1.msra.mxu0 %v238
    %263 = vmatprep.subr.mxu0 0.0
    %264 = vmatpush1.msra.mxu0 %v239
    %265 = vmatprep.subr.mxu0 0.0
    %266 = vmatpush1.msra.mxu0 %v240
    %267 = vmatprep.subr.mxu0 0.0
    %268 = vmatpush1.msra.mxu0 %v241
    %269 = vmatprep.subr.mxu0 0.0
    %270 = vmatpush1.msra.mxu0 %v242
    %271 = vmatprep.subr.mxu0 0.0
    %272 = vmatpush1.msra.mxu0 %v243
    %273 = vmatprep.subr.mxu0 0.0
    %274 = vmatpush1.msra.mxu0 %v244
    %275 = vmatprep.subr.mxu0 0.0
    %276 = vmatpush1.msra.mxu0 %v245
    %277 = vmatprep.subr.mxu0 0.0
    %278 = vmatpush1.msra.mxu0 %v246
    %279 = vmatprep.subr.mxu0 0.0
    %280 = vmatpush1.msra.mxu0 0.0
    %281 = vmatprep.subr.mxu0 0.0
    %282 = vmatpush1.msra.mxu0 0.0
    %283 = vmatprep.subr.mxu0 0.0
    %284 = vmatpush1.msra.mxu0 0.0
    %285 = vmatprep.subr.mxu0 0.0
    %286 = vmatpush1.msra.mxu0 0.0
    %287 = vmatprep.subr.mxu0 0.0
    %288 = vmatpush1.msra.mxu0 0.0
    %289 = vmatprep.subr.mxu0 0.0
    %290 = vmatpush1.msra.mxu0 0.0
    %291 = vmatprep.subr.mxu0 0.0
    %292 = vmatpush1.msra.mxu0 0.0
    %293 = vmatprep.subr.mxu0 0.0
    %294 = vmatpush1.msra.mxu0 0.0
    %295 = vmatprep.subr.mxu0 0.0
    %296 = vmatpush1.msra.mxu0 0.0
    %297 = vmatprep.subr.mxu0 0.0
    %298 = vmatpush1.msra.mxu0 0.0
    %299 = vmatprep.subr.mxu0 0.0
    %300 = vmatpush1.msra.mxu0 0.0
    %301 = vmatprep.subr.mxu0 0.0
    %302 = vmatpush1.msra.mxu0 0.0
    %303 = vmatprep.subr.mxu0 0.0
    %304 = vmatpush1.msra.mxu0 0.0
    %305 = vmatprep.subr.mxu0 0.0
    %306 = vmatpush1.msra.mxu0 0.0
    %307 = vmatprep.subr.mxu0 0.0
    %308 = vmatpush1.msra.mxu0 0.0
    %309 = vmatprep.subr.mxu0 0.0
    %310 = vmatpush1.msra.mxu0 0.0
    %311 = vmatprep.mubr.f32.mxu0 0.0
    %312 = vmatmul.mubr.f32.gmra.mrb[0].mxu0 %v230
    %v313 = vpop.f32.mrb[0].mxu0
    %v314 = vadd.f32 0.0, %v313
    %v315 = vpop.f32.mrb[0].mxu0
    %316 = vdwg.mxu0
    %v317 = vld [vmem:[#allocation2 + $0x10] sm:$0xff]
    %v318 = vadd.f32 %v317, %v314
    %v319 = vadd.f32 %v318, %v226
    %v320 = vtanh.pop %v319
    %321 = vst [vmem:[#allocation2 + $0x10] sm:$0xff] %v320
    %v322 = vld [vmem:[#allocation8 + $0x18] sm:$0xff]
    %v323 = vld [vmem:[#allocation2] sm:$0xff]
    %v324 = vld [vmem:[#allocation2 + $0x8] sm:$0xff]
    %v325 = vld [vmem:[#allocation2 + $0x10] sm:$0xff]
    %v326 = vld [vmem:[#allocation2 + $0x18] sm:$0xff]
    %v327 = vld [vmem:[#allocation2 + $0x20] sm:$0xff]
    %v328 = vld [vmem:[#allocation2 + $0x28] sm:$0xff]
    %v329 = vld [vmem:[#allocation2 + $0x30] sm:$0xff]
    %v330 = vld [vmem:[#allocation2 + $0x38] sm:$0xff]
    %v331 = vld [vmem:[#allocation2 + $0x40] sm:$0xff]
    %v332 = vld [vmem:[#allocation2 + $0x48] sm:$0xff]
    %v333 = vld [vmem:[#allocation2 + $0x50] sm:$0xff]
    %v334 = vld [vmem:[#allocation2 + $0x58] sm:$0xff]
    %v335 = vld [vmem:[#allocation2 + $0x60] sm:$0xff]
    %v336 = vld [vmem:[#allocation2 + $0x68] sm:$0xff]
    %v337 = vld [vmem:[#allocation2 + $0x70] sm:$0xff]
    %v338 = vld [vmem:[#allocation2 + $0x78] sm:$0xff]
    %339 = vmatprep.subr.mxu0 0.0
    %340 = vmatpush1.msra.mxu0 %v323
    %341 = vmatprep.subr.mxu0 0.0
    %342 = vmatpush1.msra.mxu0 %v324
    %343 = vmatprep.subr.mxu0 0.0
    %344 = vmatpush1.msra.mxu0 %v325
    %345 = vmatprep.subr.mxu0 0.0
    %346 = vmatpush1.msra.mxu0 %v326
    %347 = vmatprep.subr.mxu0 0.0
    %348 = vmatpush1.msra.mxu0 %v327
    %349 = vmatprep.subr.mxu0 0.0
    %350 = vmatpush1.msra.mxu0 %v328
    %351 = vmatprep.subr.mxu0 0.0
    %352 = vmatpush1.msra.mxu0 %v329
    %353 = vmatprep.subr.mxu0 0.0
    %354 = vmatpush1.msra.mxu0 %v330
    %355 = vmatprep.subr.mxu0 0.0
    %356 = vmatpush1.msra.mxu0 %v331
    %357 = vmatprep.subr.mxu0 0.0
    %358 = vmatpush1.msra.mxu0 %v332
    %359 = vmatprep.subr.mxu0 0.0
    %360 = vmatpush1.msra.mxu0 %v333
    %361 = vmatprep.subr.mxu0 0.0
    %362 = vmatpush1.msra.mxu0 %v334
    %363 = vmatprep.subr.mxu0 0.0
    %364 = vmatpush1.msra.mxu0 %v335
    %365 = vmatprep.subr.mxu0 0.0
    %366 = vmatpush1.msra.mxu0 %v336
    %367 = vmatprep.subr.mxu0 0.0
    %368 = vmatpush1.msra.mxu0 %v337
    %369 = vmatprep.subr.mxu0 0.0
    %370 = vmatpush1.msra.mxu0 %v338
    %371 = vmatprep.subr.mxu0 0.0
    %372 = vmatpush1.msra.mxu0 0.0
    %373 = vmatprep.subr.mxu0 0.0
    %374 = vmatpush1.msra.mxu0 0.0
    %375 = vmatprep.subr.mxu0 0.0
    %376 = vmatpush1.msra.mxu0 0.0
    %377 = vmatprep.subr.mxu0 0.0
    %378 = vmatpush1.msra.mxu0 0.0
    %379 = vmatprep.subr.mxu0 0.0
    %380 = vmatpush1.msra.mxu0 0.0
    %381 = vmatprep.subr.mxu0 0.0
    %382 = vmatpush1.msra.mxu0 0.0
    %383 = vmatprep.subr.mxu0 0.0
    %384 = vmatpush1.msra.mxu0 0.0
    %385 = vmatprep.subr.mxu0 0.0
    %386 = vmatpush1.msra.mxu0 0.0
    %387 = vmatprep.subr.mxu0 0.0
    %388 = vmatpush1.msra.mxu0 0.0
    %389 = vmatprep.subr.mxu0 0.0
    %390 = vmatpush1.msra.mxu0 0.0
    %391 = vmatprep.subr.mxu0 0.0
    %392 = vmatpush1.msra.mxu0 0.0
    %393 = vmatprep.subr.mxu0 0.0
    %394 = vmatpush1.msra.mxu0 0.0
    %395 = vmatprep.subr.mxu0 0.0
    %396 = vmatpush1.msra.mxu0 0.0
    %397 = vmatprep.subr.mxu0 0.0
    %398 = vmatpush1.msra.mxu0 0.0
    %399 = vmatprep.subr.mxu0 0.0
    %400 = vmatpush1.msra.mxu0 0.0
    %401 = vmatprep.subr.mxu0 0.0
    %402 = vmatpush1.msra.mxu0 0.0
    %403 = vmatprep.mubr.f32.mxu0 0.0
    %404 = vmatmul.mubr.f32.gmra.mrb[0].mxu0 %v322
    %v405 = vpop.f32.mrb[0].mxu0
    %v406 = vadd.f32 0.0, %v405
    %v407 = vpop.f32.mrb[0].mxu0
    %408 = vdwg.mxu0
    %v409 = vld [vmem:[#allocation2 + $0x18] sm:$0xff]
    %v410 = vadd.f32 %v409, %v406
    %v411 = vadd.f32 %v410, %v226
    %v412 = vtanh.pop %v411
    %413 = vst [vmem:[#allocation2 + $0x18] sm:$0xff] %v412
    %v414 = vld [vmem:[#allocation2] sm:$0xff]
    %v415 = vld [vmem:[#allocation2 + $0x8] sm:$0xff]
    %v416 = vld [vmem:[#allocation2 + $0x10] sm:$0xff]
    %v417 = vld [vmem:[#allocation2 + $0x18] sm:$0xff]
    %v418 = vld [vmem:[#allocation2 + $0x20] sm:$0xff]
    %v419 = vld [vmem:[#allocation2 + $0x28] sm:$0xff]
    %v420 = vld [vmem:[#allocation2 + $0x30] sm:$0xff]
    %v421 = vld [vmem:[#allocation2 + $0x38] sm:$0xff]
    %v422 = vld [vmem:[#allocation2 + $0x40] sm:$0xff]
    %v423 = vld [vmem:[#allocation2 + $0x48] sm:$0xff]
    %v424 = vld [vmem:[#allocation2 + $0x50] sm:$0xff]
    %v425 = vld [vmem:[#allocation2 + $0x58] sm:$0xff]
    %v426 = vld [vmem:[#allocation2 + $0x60] sm:$0xff]
    %v427 = vld [vmem:[#allocation2 + $0x68] sm:$0xff]
    %v428 = vld [vmem:[#allocation2 + $0x70] sm:$0xff]
    %v429 = vld [vmem:[#allocation2 + $0x78] sm:$0xff]
    %430 = vst [vmem:[#allocation10] sm:$0xff] %v414
    %431 = vst [vmem:[#allocation10 + $0x8] sm:$0xff] %v415
    %432 = vst [vmem:[#allocation10 + $0x10] sm:$0xff] %v416
    %433 = vst [vmem:[#allocation10 + $0x18] sm:$0xff] %v417
    %434 = vst [vmem:[#allocation10 + $0x20] sm:$0xff] %v418
    %435 = vst [vmem:[#allocation10 + $0x28] sm:$0xff] %v419
    %436 = vst [vmem:[#allocation10 + $0x30] sm:$0xff] %v420
    %437 = vst [vmem:[#allocation10 + $0x38] sm:$0xff] %v421
    %438 = vst [vmem:[#allocation10 + $0x40] sm:$0xff] %v422
    %439 = vst [vmem:[#allocation10 + $0x48] sm:$0xff] %v423
    %440 = vst [vmem:[#allocation10 + $0x50] sm:$0xff] %v424
    %441 = vst [vmem:[#allocation10 + $0x58] sm:$0xff] %v425
    %442 = vst [vmem:[#allocation10 + $0x60] sm:$0xff] %v426
    %443 = vst [vmem:[#allocation10 + $0x68] sm:$0xff] %v427
    %444 = vst [vmem:[#allocation10 + $0x70] sm:$0xff] %v428
    %445 = vst [vmem:[#allocation10 + $0x78] sm:$0xff] %v429
    // Predicated region
    $region26: #{_dag_prop_pallas.1} parent=1 // pred_check
      _
    $region27: #{_dag_prop_pallas.1} parent=1 // pred_check_branch
      %447 = sbr.rel (0) target = $region29
    $region28: #{_dag_prop_pallas.1} parent=1 // pred_region
      %s449 = ssub.s32 2048, 2048
      %450 = vsyncadd [#allocation5], %s449
      %s451 = sshll.u32 [#allocation10], 4
      %s452 = int_to_ptr.vmem [resolvable:$true] %s451
      %457 = dma.vmem_to_hbm [thread:$0]  %s452, 2048, %s3, [#allocation5], 128, 128, 8
    $region29: #{_dag_prop_pallas.1} parent=1 // pred_fallthru
      _
    // Predicated region
    $region30: #{_dag_prop_pallas.1} parent=1 // pred_check
      _
    $region31: #{_dag_prop_pallas.1} parent=1 // pred_check_branch
      %459 = sbr.rel (0) target = $region33
    $region32: #{_dag_prop_pallas.1} parent=1 // pred_region
      %460 = dma.done [#allocation5], 2048
    $region33: #{_dag_prop_pallas.1} parent=1 // pred_fallthru
      _
    %461 = vsyncpa [#allocation4], 1
    %462 = vsyncpa [#allocation9], 1
    %463 = vsyncpa [#allocation5], 1
    %464 = vsyncpa [#allocation6], 1

</llo_original>
